<compile_context>
chip_gen: v6e
topology: v6e:2x2x1
jax: 0.10.0
libtpu: 0.0.40
codegen_flags: <defaults>
</compile_context>

<pallas_src>
import functools

import jax
import jax.numpy as jnp
from jax.experimental import pallas as pl
from jax.experimental.pallas import tpu as pltpu


# --------------------------------------------------------------------------- #
# Helpers (plain JAX / Python)
# --------------------------------------------------------------------------- #
def _interp_matrix(out_size: int, in_size: int) -> jnp.ndarray:
    """Row-stochastic (out_size, in_size) matrix implementing 1-D bilinear
    interpolation with align_corners=True (PyTorch F.interpolate semantics)."""
    if out_size == 1:
        src = jnp.zeros((1,), jnp.float32)
    else:
        src = jnp.arange(out_size, dtype=jnp.float32) * (in_size - 1) / (out_size - 1)
    lo = jnp.clip(jnp.floor(src).astype(jnp.int32), 0, in_size - 1)
    hi = jnp.clip(lo + 1, 0, in_size - 1)
    frac = src - lo.astype(jnp.float32)
    m = (jax.nn.one_hot(lo, in_size, dtype=jnp.float32) * (1.0 - frac)[:, None]
         + jax.nn.one_hot(hi, in_size, dtype=jnp.float32) * frac[:, None])
    return m


def _round_up(x: int, m: int) -> int:
    return ((x + m - 1) // m) * m


def _vmem_limit_target() -> int:
    """Generation-aware scoped-VMEM ceiling (leave headroom below physical)."""
    try:
        cap = int(pltpu.get_tpu_info().vmem_capacity_bytes)
    except Exception:
        cap = 64 << 20  # conservative default
    if cap <= (64 << 20):       # v7x-class: 64 MiB physical per TensorCore
        return 48 << 20
    return 64 << 20             # v5e / v6e: 128 MiB physical


def _pick_tiles(N: int, C: int, HW: int, block_budget_f32: int):
    """Choose (C_pad, tc, HW_pad, t_hw) such that
       * tc   is a multiple of 16 dividing C_pad   (bf16 sublane tiling),
       * t_hw is a multiple of 128 dividing HW_pad (lane tiling),
       * one (tc, t_hw) f32 block fits the per-block budget,
       * the grid has >= 2 steps when possible (keeps both v7x TCs busy)."""
    C_pad = _round_up(C, 16)
    if HW <= 2048:
        t_hw = _round_up(HW, 128)
        HW_pad = t_hw
    else:
        t_hw = 2048
        HW_pad = _round_up(HW, t_hw)

    max_tc = max(16, block_budget_f32 // (t_hw * 4))
    tc = 16
    t = 16
    while t <= C_pad:
        if C_pad % t == 0 and t <= max_tc:
            tc = t
        t += 16

    # Best effort: guarantee at least 2 grid steps (v7x has 2 TensorCores).
    if (N * (C_pad // tc) * (HW_pad // t_hw) < 2
            and C_pad >= 32 and (C_pad // 2) % 16 == 0):
        tc = C_pad // 2
    return C_pad, tc, HW_pad, t_hw


# --------------------------------------------------------------------------- #
# Pallas kernel
# --------------------------------------------------------------------------- #
def _triple_loss_kernel(fi_ref, ff_ref, fb_ref, a_ref, orth_ref, comp_ref,
                        *, max_gap):
    # bf16 inputs are upcast to f32 for the math; accumulations stay in f32.
    fi = fi_ref[0].astype(jnp.float32)        # (tc, t_hw)
    ff = ff_ref[0].astype(jnp.float32)
    fb = fb_ref[0].astype(jnp.float32)
    alpha_up = a_ref[0]                        # (1, t_hw) f32, broadcasts over C

    mask = jnp.where(alpha_up < 0.1, 0.0, 1.0)

    # Orthogonal term partials: NO abs here — abs is only exact after the
    # *complete* per-channel spatial sum, so each (n, c-tile, hw-tile) step emits
    # plain per-channel sums and the JAX epilogue does
    # sum-over-hw-tiles -> abs -> mean.
    diff = (ff - fb) * mask
    diff = jnp.where(jnp.abs(diff) > max_gap, 0.0, diff)
    orth_row = jnp.sum(diff, axis=-1)                      # (tc,)

    # Compose term, folded: F_I - (F_F + F_B*(1-a)) == (fi - ff - fb) + fb*a
    comp = (fi - ff - fb) + fb * alpha_up
    comp_row = jnp.sum(comp * comp, axis=-1)               # (tc,)

    orth_ref[...] = orth_row.reshape(1, 1, 1, 1, -1)
    comp_ref[...] = comp_row.reshape(1, 1, 1, 1, -1)


# --------------------------------------------------------------------------- #
# Wrapper
# --------------------------------------------------------------------------- #
def triple_loss(F_I, F_F, F_B, alpha, *, max_gap=5.0, stream_dtype=jnp.bfloat16):
    """Returns (orthogonal_loss, compose_loss) scalars, matching TripleLoss.forward.

    The three feature maps are streamed to the kernel in `stream_dtype`
    (bf16 by default — the kernel is HBM-bandwidth bound); pass jnp.float32 for
    bit-faithful f32 streaming."""
    N, C, H, W = F_I.shape
    Na, ac, h, w = alpha.shape
    assert Na == N and ac == 1, "alpha assumed (N, 1, h, w), broadcast over C"
    HW = H * W

    # Bilinear upsample (align_corners=True) hoisted out of the kernel: two tiny
    # matmuls in plain JAX, fed in as a lane-dense (N, 1, HW) f32 map.
    R_h = _interp_matrix(H, h)
    R_w = _interp_matrix(W, w)
    alpha_up = jnp.einsum('Hh,nhw,Ww->nHW', R_h,
                          alpha[:, 0].astype(jnp.float32), R_w)
    alpha_flat = alpha_up.reshape(N, 1, HW).astype(jnp.float32)

    # Generation-aware block sizing.
    vmem_target = _vmem_limit_target()
    block_budget_f32 = vmem_target // 12
    C_pad, tc, HW_pad, t_hw = _pick_tiles(N, C, HW, block_budget_f32)
    nct = C_pad // tc
    n_hw = HW_pad // t_hw

    def prep(x):
        x = x.reshape(N, C, HW)
        if C_pad != C or HW_pad != HW:
            # Zero padding is exact: padded elements contribute 0 to both terms.
            x = jnp.pad(x, ((0, 0), (0, C_pad - C), (0, HW_pad - HW)))
        return x.astype(stream_dtype)

    fi, ff, fb = prep(F_I), prep(F_F), prep(F_B)
    if HW_pad != HW:
        alpha_flat = jnp.pad(alpha_flat, ((0, 0), (0, 0), (0, HW_pad - HW)))

    # VMEM accounting: 3 streamed inputs (double-buffered) + f32 upcasts and
    # elementwise temporaries + alpha/out buffers + Mosaic internal scratch.
    stream_bytes = jnp.dtype(stream_dtype).itemsize
    block_stream = tc * t_hw * stream_bytes
    block_f32 = tc * t_hw * 4
    vmem_need = (3 * 2 * block_stream      # fi/ff/fb double buffers
                 + 4 * block_f32           # upcasts + diff/comp temporaries
                 + 2 * t_hw * 4            # alpha double buffer
                 + 2 * 2 * 2 * tc * 4      # two outputs, double-buffered
                 + (2 << 20))              # internal scratch slack
    vmem_limit = int(min(vmem_target, max(32 << 20, vmem_need)))

    cost = pl.CostEstimate(
        flops=int(10 * N * C_pad * HW_pad),
        transcendentals=0,
        bytes_accessed=int(3 * stream_bytes * N * C_pad * HW_pad
                           + 4 * N * HW_pad
                           + 2 * 4 * N * nct * n_hw * tc),
    )

    kernel = functools.partial(_triple_loss_kernel, max_gap=float(max_gap))

    orth_parts, comp_parts = pl.pallas_call(
        kernel,
        out_shape=(jax.ShapeDtypeStruct((N, nct, n_hw, 1, tc), jnp.float32),
                   jax.ShapeDtypeStruct((N, nct, n_hw, 1, tc), jnp.float32)),
        grid_spec=pltpu.PrefetchScalarGridSpec(
            num_scalar_prefetch=0,
            grid=(N, nct, n_hw),
            in_specs=[
                pl.BlockSpec((1, tc, t_hw), lambda n, c, s: (n, c, s)),   # F_I
                pl.BlockSpec((1, tc, t_hw), lambda n, c, s: (n, c, s)),   # F_F
                pl.BlockSpec((1, tc, t_hw), lambda n, c, s: (n, c, s)),   # F_B
                pl.BlockSpec((1, 1, t_hw), lambda n, c, s: (n, 0, s)),    # alpha_up
            ],
            out_specs=[
                pl.BlockSpec((1, 1, 1, 1, tc), lambda n, c, s: (n, c, s, 0, 0)),
                pl.BlockSpec((1, 1, 1, 1, tc), lambda n, c, s: (n, c, s, 0, 0)),
            ],
        ),
        compiler_params=pltpu.CompilerParams(
            dimension_semantics=("parallel", "parallel", "parallel"),
            vmem_limit_bytes=vmem_limit),
        cost_estimate=cost,
    )(fi, ff, fb, alpha_flat)

    # JAX epilogue: sum spatial-tile partials FIRST, then abs (orth exactness),
    # then normalize with the ORIGINAL (unpadded) sizes.
    per_channel = jnp.sum(orth_parts[:, :, :, 0, :], axis=2)      # (N, nct, tc)
    per_channel = per_channel.reshape(N, C_pad)[:, :C]
    orth = -jnp.sum(jnp.abs(per_channel)) / (N * C)
    comp = jnp.sum(comp_parts) / (N * C * HW)
    return orth, comp


# --------------------------------------------------------------------------- #
# Pure-JAX reference (mirrors the PyTorch forward; optionally mirrors the
# kernel's bf16 streaming of the feature maps so the check is tight).
# --------------------------------------------------------------------------- #
def _reference(F_I, F_F, F_B, alpha, *, max_gap=5.0, stream_dtype=jnp.bfloat16):
    N, C, H, W = F_I.shape
    h, w = alpha.shape[-2:]
    R_h = _interp_matrix(H, h)
    R_w = _interp_matrix(W, w)
    alpha_up = jnp.einsum('Hh,nchw,Ww->ncHW', R_h,
                          alpha.astype(jnp.float32), R_w)       # (N,1,H,W)
    q = lambda x: x.astype(stream_dtype).astype(jnp.float32)
    F_I, F_F, F_B = q(F_I), q(F_F), q(F_B)
    mask = jnp.where(alpha_up < 0.1, 0.0, 1.0)
    orth = (F_F - F_B) * mask
    orth = jnp.where(jnp.abs(orth) > max_gap, 0.0, orth)
    orth = jnp.abs(jnp.sum(orth, axis=(-1, -2)))
    orth = -jnp.mean(orth)
    comp = F_I - (F_F + F_B * (1 - alpha_up))
    comp = jnp.mean(comp ** 2)
    return orth, comp


if __name__ == "__main__":
    key = jax.random.PRNGKey(0)
    k1, k2, k3, k4 = jax.random.split(key, 4)

    N, C, H, W = 2, 4, 16, 16
    h, w = 8, 8   # low-res alpha, upsampled to (H, W)

    F_I = jax.random.normal(k1, (N, C, H, W), jnp.float32) * 3.0
    F_F = jax.random.normal(k2, (N, C, H, W), jnp.float32) * 4.0
    F_B = jax.random.normal(k3, (N, C, H, W), jnp.float32) * 4.0
    alpha = jax.random.uniform(k4, (N, 1, h, w), jnp.float32)

    orth, comp = triple_loss(F_I, F_F, F_B, alpha)
    jax.block_until_ready((orth, comp))

    ref_orth, ref_comp = _reference(F_I, F_F, F_B, alpha)
    assert jnp.allclose(orth, ref_orth, atol=1e-3, rtol=1e-4), (orth, ref_orth)
    assert jnp.allclose(comp, ref_comp, atol=1e-3, rtol=1e-4), (comp, ref_comp)

    print("KERNEL_OK")
</pallas_src>

<mosaic_0001>
module attributes {stable_mosaic.version = 11 : i64} {
  func.func @_triple_loss_kernel(%arg0: i32, %arg1: i32, %arg2: i32, %arg3: memref<1x16x256xbf16, #tpu.memory_space<vmem>>, %arg4: memref<1x16x256xbf16, #tpu.memory_space<vmem>>, %arg5: memref<1x16x256xbf16, #tpu.memory_space<vmem>>, %arg6: memref<1x1x256xf32, #tpu.memory_space<vmem>>, %arg7: memref<1x1x1x1x16xf32, #tpu.memory_space<vmem>>, %arg8: memref<1x1x1x1x16xf32, #tpu.memory_space<vmem>>) attributes {dimension_semantics = [#tpu.dimension_semantics<parallel>, #tpu.dimension_semantics<parallel>, #tpu.dimension_semantics<parallel>], iteration_bounds = array<i64: 2, 1, 1>, scalar_prefetch = 0 : i64, scratch_operands = 0 : i64, tpu.core_type = #tpu.core_type<tc>, window_params = [{transform_indices = @transform_0, window_bounds = array<i64: 1, 16, 256>}, {transform_indices = @transform_1, window_bounds = array<i64: 1, 16, 256>}, {transform_indices = @transform_2, window_bounds = array<i64: 1, 16, 256>}, {transform_indices = @transform_3, window_bounds = array<i64: 1, 1, 256>}, {transform_indices = @transform_4, window_bounds = array<i64: 1, 1, 1, 1, 16>}, {transform_indices = @transform_5, window_bounds = array<i64: 1, 1, 1, 1, 16>}]} {
    %c0 = arith.constant 0 : index
    %c0_0 = arith.constant 0 : index
    %c0_1 = arith.constant 0 : index
    %0 = vector.load %arg3[%c0, %c0_0, %c0_1] : memref<1x16x256xbf16, #tpu.memory_space<vmem>>, vector<1x16x256xbf16>
    %1 = vector.shape_cast %0 : vector<1x16x256xbf16> to vector<16x256xbf16>
    %2 = arith.extf %1 : vector<16x256xbf16> to vector<16x256xf32>
    %c0_2 = arith.constant 0 : index
    %c0_3 = arith.constant 0 : index
    %c0_4 = arith.constant 0 : index
    %3 = vector.load %arg4[%c0_2, %c0_3, %c0_4] : memref<1x16x256xbf16, #tpu.memory_space<vmem>>, vector<1x16x256xbf16>
    %4 = vector.shape_cast %3 : vector<1x16x256xbf16> to vector<16x256xbf16>
    %5 = arith.extf %4 : vector<16x256xbf16> to vector<16x256xf32>
    %c0_5 = arith.constant 0 : index
    %c0_6 = arith.constant 0 : index
    %c0_7 = arith.constant 0 : index
    %6 = vector.load %arg5[%c0_5, %c0_6, %c0_7] : memref<1x16x256xbf16, #tpu.memory_space<vmem>>, vector<1x16x256xbf16>
    %7 = vector.shape_cast %6 : vector<1x16x256xbf16> to vector<16x256xbf16>
    %8 = arith.extf %7 : vector<16x256xbf16> to vector<16x256xf32>
    %c0_8 = arith.constant 0 : index
    %c0_9 = arith.constant 0 : index
    %c0_10 = arith.constant 0 : index
    %9 = vector.load %arg6[%c0_8, %c0_9, %c0_10] : memref<1x1x256xf32, #tpu.memory_space<vmem>>, vector<1x1x256xf32>
    %10 = vector.shape_cast %9 : vector<1x1x256xf32> to vector<1x256xf32>
    %cst = arith.constant 1.000000e-01 : f32
    %11 = vector.broadcast %cst : f32 to vector<1x256xf32>
    %12 = arith.cmpf olt, %10, %11 : vector<1x256xf32>
    %cst_11 = arith.constant 0.000000e+00 : f32
    %cst_12 = arith.constant 1.000000e+00 : f32
    %13 = vector.broadcast %cst_11 : f32 to vector<1x256xf32>
    %14 = vector.broadcast %cst_12 : f32 to vector<1x256xf32>
    %15 = arith.select %12, %13, %14 : vector<1x256xi1>, vector<1x256xf32>
    %16 = arith.subf %5, %8 : vector<16x256xf32>
    %17 = vector.broadcast %15 : vector<1x256xf32> to vector<16x256xf32>
    %18 = arith.mulf %16, %17 : vector<16x256xf32>
    %19 = math.absf %18 : vector<16x256xf32>
    %cst_13 = arith.constant 5.000000e+00 : f32
    %20 = vector.broadcast %cst_13 : f32 to vector<16x256xf32>
    %21 = arith.cmpf ogt, %19, %20 : vector<16x256xf32>
    %cst_14 = arith.constant 0.000000e+00 : f32
    %22 = vector.broadcast %cst_14 : f32 to vector<16x256xf32>
    %23 = arith.select %21, %22, %18 : vector<16x256xi1>, vector<16x256xf32>
    %cst_15 = arith.constant dense<0.000000e+00> : vector<16xf32>
    %24 = vector.multi_reduction <add>, %23, %cst_15 [1] : vector<16x256xf32> to vector<16xf32>
    %25 = arith.subf %2, %5 : vector<16x256xf32>
    %26 = arith.subf %25, %8 : vector<16x256xf32>
    %27 = vector.broadcast %10 : vector<1x256xf32> to vector<16x256xf32>
    %28 = arith.mulf %8, %27 : vector<16x256xf32>
    %29 = arith.addf %26, %28 : vector<16x256xf32>
    %30 = arith.mulf %29, %29 : vector<16x256xf32>
    %cst_16 = arith.constant dense<0.000000e+00> : vector<16xf32>
    %31 = vector.multi_reduction <add>, %30, %cst_16 [1] : vector<16x256xf32> to vector<16xf32>
    %32 = vector.shape_cast %24 : vector<16xf32> to vector<1x1x1x1x16xf32>
    %c0_17 = arith.constant 0 : index
    %c0_18 = arith.constant 0 : index
    %c0_19 = arith.constant 0 : index
    %c0_20 = arith.constant 0 : index
    %c0_21 = arith.constant 0 : index
    %33 = vector.load %arg7[%c0_17, %c0_18, %c0_19, %c0_20, %c0_21] : memref<1x1x1x1x16xf32, #tpu.memory_space<vmem>>, vector<1x1x1x1x16xf32>
    tpu.vector_store %arg7[%c0_17, %c0_18, %c0_19, %c0_20, %c0_21], %32 {strides = array<i32>} : memref<1x1x1x1x16xf32, #tpu.memory_space<vmem>>, vector<1x1x1x1x16xf32>,
    %34 = vector.shape_cast %31 : vector<16xf32> to vector<1x1x1x1x16xf32>
    %c0_22 = arith.constant 0 : index
    %c0_23 = arith.constant 0 : index
    %c0_24 = arith.constant 0 : index
    %c0_25 = arith.constant 0 : index
    %c0_26 = arith.constant 0 : index
    %35 = vector.load %arg8[%c0_22, %c0_23, %c0_24, %c0_25, %c0_26] : memref<1x1x1x1x16xf32, #tpu.memory_space<vmem>>, vector<1x1x1x1x16xf32>
    tpu.vector_store %arg8[%c0_22, %c0_23, %c0_24, %c0_25, %c0_26], %34 {strides = array<i32>} : memref<1x1x1x1x16xf32, #tpu.memory_space<vmem>>, vector<1x1x1x1x16xf32>,
    return
  }
  func.func @transform_0(%arg0: i32, %arg1: i32, %arg2: i32) -> (i32, i32, i32) {
    %c0_i32 = arith.constant 0 : i32
    return %arg0, %arg1, %arg2 : i32, i32, i32
  }
  func.func @transform_1(%arg0: i32, %arg1: i32, %arg2: i32) -> (i32, i32, i32) {
    %c0_i32 = arith.constant 0 : i32
    return %arg0, %arg1, %arg2 : i32, i32, i32
  }
  func.func @transform_2(%arg0: i32, %arg1: i32, %arg2: i32) -> (i32, i32, i32) {
    %c0_i32 = arith.constant 0 : i32
    return %arg0, %arg1, %arg2 : i32, i32, i32
  }
  func.func @transform_3(%arg0: i32, %arg1: i32, %arg2: i32) -> (i32, i32, i32) {
    %c0_i32 = arith.constant 0 : i32
    %c0_i32_0 = arith.constant 0 : i32
    return %arg0, %c0_i32, %arg2 : i32, i32, i32
  }
  func.func @transform_4(%arg0: i32, %arg1: i32, %arg2: i32) -> (i32, i32, i32, i32, i32) {
    %c0_i32 = arith.constant 0 : i32
    %c0_i32_0 = arith.constant 0 : i32
    %c0_i32_1 = arith.constant 0 : i32
    return %arg0, %arg1, %arg2, %c0_i32, %c0_i32_0 : i32, i32, i32, i32, i32
  }
  func.func @transform_5(%arg0: i32, %arg1: i32, %arg2: i32) -> (i32, i32, i32, i32, i32) {
    %c0_i32 = arith.constant 0 : i32
    %c0_i32_0 = arith.constant 0 : i32
    %c0_i32_1 = arith.constant 0 : i32
    return %arg0, %arg1, %arg2, %c0_i32, %c0_i32_0 : i32, i32, i32, i32, i32
  }
}

</mosaic_0001>

<llo_original>
// kernel: tpu_custom_call.1
$region0: #{tpu_custom_call.1}
  #allocation0 [shape = 'u32[]', space=smem, size = 0x4, offset = 0x4, fixed_abs, tag = 'smem constant byte address 0x4 - core index']
  #allocation1 [shape = 'u32[144,128]{1,0:T(1,128)}', space=vmem, size = 0x12000, scoped, tag = 'internal scratch']
  %s0 = inlined_call_operand.hbm [shape: bf16[2,16,256], index: 0, kind: input, shape index: {}]
  %s1 = inlined_call_operand.hbm [shape: bf16[2,16,256], index: 1, kind: input, shape index: {}]
  %s2 = inlined_call_operand.hbm [shape: bf16[2,16,256], index: 2, kind: input, shape index: {}]
  %s3 = inlined_call_operand.vmem [shape: f32[2,1,256], index: 3, kind: input, shape index: {}]
  %s4 = inlined_call_operand.hbm [shape: f32[2,1,1,1,16], index: 4, kind: output, shape index: {0}]
  %s5 = inlined_call_operand.hbm [shape: f32[2,1,1,1,16], index: 5, kind: output, shape index: {1}]
  %6 = xla_tuple %s4, %s5
  %s7 = sld [smem:[#allocation0]]
  $region69: #{tpu_custom_call.1} parent=0
    _
  %s9 = ssub.s32 1, %s7
  %s10 = scalar_select 0, %s9, %s7
  $region1: #{tpu_custom_call.1} parent=0
    #allocation2 [shape = 'u8[16384]{0}', space=vmem, size = 0x4000, scoped, tag = 'input window, operand 0']
    #allocation3 [shape = 's32[2]{0}', space=sflag, size = 0x8, scoped, tag = 'scoped memory for tpu_custom_call.1']
    #allocation4 [shape = 's32[2]{0}', space=sflag, size = 0x8, scoped, tag = 'scoped memory for tpu_custom_call.1']
    #allocation5 [shape = 'u8[16384]{0}', space=vmem, size = 0x4000, scoped, tag = 'input window, operand 1']
    #allocation6 [shape = 's32[2]{0}', space=sflag, size = 0x8, scoped, tag = 'scoped memory for tpu_custom_call.1']
    #allocation7 [shape = 'u8[16384]{0}', space=vmem, size = 0x4000, scoped, tag = 'input window, operand 2']
    #allocation8 [shape = 'u8[1024]{0}', space=vmem, size = 0x400, scoped, tag = 'output window, operand 0']
    #allocation9 [shape = 'u8[1024]{0}', space=vmem, size = 0x400, scoped, tag = 'output window, operand 1']
    #allocation10 [shape = 's32[2]{0}', space=sflag, size = 0x8, scoped, tag = 'scoped memory for tpu_custom_call.1']
    %11 = vsyncpa [#allocation3], 0
    %s12 = scalar_lea.sflag [#allocation3], 1
    %13 = vsyncpa %s12, 0
    %14 = vsyncpa [#allocation6], 0
    %s15 = scalar_lea.sflag [#allocation6], 1
    %16 = vsyncpa %s15, 0
    %17 = vsyncpa [#allocation4], 0
    %s18 = scalar_lea.sflag [#allocation4], 1
    %19 = vsyncpa %s18, 0
    %20 = vsyncpa [#allocation10], 0
    %s21 = scalar_lea.sflag [#allocation10], 1
    %22 = vsyncpa %s21, 0
    loop: start=0, step=1, limit=4
    $region2: #{tpu_custom_call.1} parent=1 // loop_pre_header
      _
    $region3: #{tpu_custom_call.1} parent=1 // loop_header
      %s24 = sphi 0, %s28
      %p25 = scmp.ge.s32.totalorder %s24, 4
      %s31 = sphi 0, %s50
      %s32 = sphi 0, %s46
      %s33 = sphi 0, %s42
      %s34 = sphi 0, %s31
      %s35 = sphi 0, %s32
      %s36 = sphi 0, %s33
      %s37 = sphi 0, %s34
      %s38 = sphi 0, %s35
      %s39 = sphi 0, %s36
      %s57 = sphi 0, %s59
      %s60 = sphi 0, %s57
      %s61 = sphi 0, %s60
      %s77 = sphi 0, %s61
      %s87 = sphi 0, %s89
      %s90 = sphi 0, %s87
      %s91 = sphi 0, %s90
      %s107 = sphi 0, %s91
      %s117 = sphi 0, %s119
      %s120 = sphi 0, %s117
      %s121 = sphi 0, %s120
      %s137 = sphi 0, %s121
      %s145 = sphi 0, %s147
      %s148 = sphi 0, %s145
      %s149 = sphi 0, %s148
      %s165 = sphi 0, %s149
      %s175 = sphi 0, %s177
      %s178 = sphi 0, %s175
      %s179 = sphi 0, %s178
      %s195 = sphi 0, %s179
      %s205 = sphi 0, %s207
      %s208 = sphi 0, %s205
      %s209 = sphi 0, %s208
      %s225 = sphi 0, %s209
    $region4: #{tpu_custom_call.1} parent=1 // loop_header_branch
      %27 = sbr.rel (%p25) target = $region8
    $region5: #{tpu_custom_call.1} parent=1 // loop_body
      %s29 = ssub.s32 %s24, 1
      %s30 = ssub.s32 %s24, 2
      %s40 = sadd.s32 1, %s33
      %p41 = scmp.ge.s32.totalorder %s40, 1
      %s42 = scalar_select %p41, 0, %s40
      %s43 = sadd.s32 1, %s32
      %s44 = scalar_select %p41, %s43, %s32
      %p45 = scmp.ge.s32.totalorder %s44, 1
      %s46 = scalar_select %p45, 0, %s44
      %s47 = sadd.s32 1, %s31
      %s48 = scalar_select %p45, %s47, %s31
      %p49 = scmp.ge.s32.totalorder %s48, 2
      %s50 = scalar_select %p49, 0, %s48
      %s51 = ssub.s32 %s31, %s50
      %s52 = ssub.s32 %s32, %s46
      %s53 = sor.u32 %s51, %s52
      %s54 = ssub.s32 %s33, %s42
      %s55 = sor.u32 %s53, %s54
      %p56 = scmp.eq.s32.totalorder %s55, 0
      %s58 = sadd.s32 %s57, 1
      %s59 = scalar_select %p56, %s57, %s58
      %p62 = pneg %p56
      %p63 = scmp.eq.s32.totalorder %s24, 1
      %p64 = por %p62, %p63
      %p65 = scmp.ne.s32.totalorder %s57, %s60
      %p66 = scmp.eq.s32.totalorder %s24, 0
      %p67 = por %p65, %p66
      %p68 = scmp.ne.s32.totalorder %s57, %s60
      %p69 = scmp.eq.s32.totalorder %s29, 1
      %p70 = por %p68, %p69
      %p71 = scmp.ne.s32.totalorder %s60, %s61
      %p72 = scmp.eq.s32.totalorder %s29, 0
      %p73 = por %p71, %p72
      %p74 = scmp.ne.s32.totalorder %s60, %s61
      %p75 = scmp.eq.s32.totalorder %s30, 1
      %p76 = por %p74, %p75
      %p78 = scmp.ne.s32.totalorder %s61, %s77
      %p79 = scmp.eq.s32.totalorder %s30, 0
      %p80 = por %p78, %p79
      %s81 = ssub.s32 %s31, %s50
      %s82 = ssub.s32 %s32, %s46
      %s83 = sor.u32 %s81, %s82
      %s84 = ssub.s32 %s33, %s42
      %s85 = sor.u32 %s83, %s84
      %p86 = scmp.eq.s32.totalorder %s85, 0
      %s88 = sadd.s32 %s87, 1
      %s89 = scalar_select %p86, %s87, %s88
      %p92 = pneg %p86
      %p93 = scmp.eq.s32.totalorder %s24, 1
      %p94 = por %p92, %p93
      %p95 = scmp.ne.s32.totalorder %s87, %s90
      %p96 = scmp.eq.s32.totalorder %s24, 0
      %p97 = por %p95, %p96
      %p98 = scmp.ne.s32.totalorder %s87, %s90
      %p99 = scmp.eq.s32.totalorder %s29, 1
      %p100 = por %p98, %p99
      %p101 = scmp.ne.s32.totalorder %s90, %s91
      %p102 = scmp.eq.s32.totalorder %s29, 0
      %p103 = por %p101, %p102
      %p104 = scmp.ne.s32.totalorder %s90, %s91
      %p105 = scmp.eq.s32.totalorder %s30, 1
      %p106 = por %p104, %p105
      %p108 = scmp.ne.s32.totalorder %s91, %s107
      %p109 = scmp.eq.s32.totalorder %s30, 0
      %p110 = por %p108, %p109
      %s111 = ssub.s32 %s31, %s50
      %s112 = ssub.s32 %s32, %s46
      %s113 = sor.u32 %s111, %s112
      %s114 = ssub.s32 %s33, %s42
      %s115 = sor.u32 %s113, %s114
      %p116 = scmp.eq.s32.totalorder %s115, 0
      %s118 = sadd.s32 %s117, 1
      %s119 = scalar_select %p116, %s117, %s118
      %p122 = pneg %p116
      %p123 = scmp.eq.s32.totalorder %s24, 1
      %p124 = por %p122, %p123
      %p125 = scmp.ne.s32.totalorder %s117, %s120
      %p126 = scmp.eq.s32.totalorder %s24, 0
      %p127 = por %p125, %p126
      %p128 = scmp.ne.s32.totalorder %s117, %s120
      %p129 = scmp.eq.s32.totalorder %s29, 1
      %p130 = por %p128, %p129
      %p131 = scmp.ne.s32.totalorder %s120, %s121
      %p132 = scmp.eq.s32.totalorder %s29, 0
      %p133 = por %p131, %p132
      %p134 = scmp.ne.s32.totalorder %s120, %s121
      %p135 = scmp.eq.s32.totalorder %s30, 1
      %p136 = por %p134, %p135
      %p138 = scmp.ne.s32.totalorder %s121, %s137
      %p139 = scmp.eq.s32.totalorder %s30, 0
      %p140 = por %p138, %p139
      %s141 = ssub.s32 %s31, %s50
      %s142 = ssub.s32 %s33, %s42
      %s143 = sor.u32 %s141, %s142
      %p144 = scmp.eq.s32.totalorder %s143, 0
      %s146 = sadd.s32 %s145, 1
      %s147 = scalar_select %p144, %s145, %s146
      %p150 = pneg %p144
      %p151 = scmp.eq.s32.totalorder %s24, 1
      %p152 = por %p150, %p151
      %p153 = scmp.ne.s32.totalorder %s145, %s148
      %p154 = scmp.eq.s32.totalorder %s24, 0
      %p155 = por %p153, %p154
      %p156 = scmp.ne.s32.totalorder %s145, %s148
      %p157 = scmp.eq.s32.totalorder %s29, 1
      %p158 = por %p156, %p157
      %p159 = scmp.ne.s32.totalorder %s148, %s149
      %p160 = scmp.eq.s32.totalorder %s29, 0
      %p161 = por %p159, %p160
      %p162 = scmp.ne.s32.totalorder %s148, %s149
      %p163 = scmp.eq.s32.totalorder %s30, 1
      %p164 = por %p162, %p163
      %p166 = scmp.ne.s32.totalorder %s149, %s165
      %p167 = scmp.eq.s32.totalorder %s30, 0
      %p168 = por %p166, %p167
      %s169 = ssub.s32 %s31, %s50
      %s170 = ssub.s32 %s32, %s46
      %s171 = sor.u32 %s169, %s170
      %s172 = ssub.s32 %s33, %s42
      %s173 = sor.u32 %s171, %s172
      %p174 = scmp.eq.s32.totalorder %s173, 0
      %s176 = sadd.s32 %s175, 1
      %s177 = scalar_select %p174, %s175, %s176
      %p180 = pneg %p174
      %p181 = scmp.eq.s32.totalorder %s24, 1
      %p182 = por %p180, %p181
      %p183 = scmp.ne.s32.totalorder %s175, %s178
      %p184 = scmp.eq.s32.totalorder %s24, 0
      %p185 = por %p183, %p184
      %p186 = scmp.ne.s32.totalorder %s175, %s178
      %p187 = scmp.eq.s32.totalorder %s29, 1
      %p188 = por %p186, %p187
      %p189 = scmp.ne.s32.totalorder %s178, %s179
      %p190 = scmp.eq.s32.totalorder %s29, 0
      %p191 = por %p189, %p190
      %p192 = scmp.ne.s32.totalorder %s178, %s179
      %p193 = scmp.eq.s32.totalorder %s30, 1
      %p194 = por %p192, %p193
      %p196 = scmp.ne.s32.totalorder %s179, %s195
      %p197 = scmp.eq.s32.totalorder %s30, 0
      %p198 = por %p196, %p197
      %s199 = ssub.s32 %s31, %s50
      %s200 = ssub.s32 %s32, %s46
      %s201 = sor.u32 %s199, %s200
      %s202 = ssub.s32 %s33, %s42
      %s203 = sor.u32 %s201, %s202
      %p204 = scmp.eq.s32.totalorder %s203, 0
      %s206 = sadd.s32 %s205, 1
      %s207 = scalar_select %p204, %s205, %s206
      %p210 = pneg %p204
      %p211 = scmp.eq.s32.totalorder %s24, 1
      %p212 = por %p210, %p211
      %p213 = scmp.ne.s32.totalorder %s205, %s208
      %p214 = scmp.eq.s32.totalorder %s24, 0
      %p215 = por %p213, %p214
      %p216 = scmp.ne.s32.totalorder %s205, %s208
      %p217 = scmp.eq.s32.totalorder %s29, 1
      %p218 = por %p216, %p217
      %p219 = scmp.ne.s32.totalorder %s208, %s209
      %p220 = scmp.eq.s32.totalorder %s29, 0
      %p221 = por %p219, %p220
      %p222 = scmp.ne.s32.totalorder %s208, %s209
      %p223 = scmp.eq.s32.totalorder %s30, 1
      %p224 = por %p222, %p223
      %p226 = scmp.ne.s32.totalorder %s209, %s225
      %p227 = scmp.eq.s32.totalorder %s30, 0
      %p228 = por %p226, %p227
      %p229 = scmp.le.s32.totalorder 1, %s24
      %p230 = scmp.lt.s32.totalorder %s24, 3
      %p231 = pnand %p229, %p230
      %p232 = pneg %p231
      // Predicated region
      $region9: #{tpu_custom_call.1} parent=5 // pred_check
        _
      $region10: #{tpu_custom_call.1} parent=5 // pred_check_branch
        %234 = sbr.rel (%p231) target = $region12
      $region11: #{tpu_custom_call.1} parent=5 // pred_region
        %s235 = ssub.s32 %s24, 1
      $region12: #{tpu_custom_call.1} parent=5 // pred_fallthru
        _
      %p236 = scmp.lt.s32.totalorder %s24, 2
      // Predicated region
      $region13: #{tpu_custom_call.1} parent=5 // pred_check
        %p237 = pneg %p236
      $region14: #{tpu_custom_call.1} parent=5 // pred_check_branch
        %239 = sbr.rel (%p237) target = $region16
      $region15: #{tpu_custom_call.1} parent=5 // pred_region
        // Predicated region
        $region17: #{tpu_custom_call.1} parent=15 // pred_check
          %p240 = pneg %p67
        $region18: #{tpu_custom_call.1} parent=15 // pred_check_branch
          %242 = sbr.rel (%p240) target = $region20
        $region19: #{tpu_custom_call.1} parent=15 // pred_region
          %s243 = sand.u32 %s57, 1
          %s244 = scalar_lea.sflag [#allocation3], %s243
          %s245 = sand.u32 %s57, 1
          %s246 = smul.addr %s245, 16
          %s247 = scalar_lea.vmem [#allocation2], %s246
          %s248 = smul.u32 2, %s32
          %s249 = smul.u32 2, %s33
          %s251 = ssub.s32 256, 256
          %252 = vsyncadd %s244, %s251
          %s253 = smul.addr %s248, 2
          %s254 = sadd.s32 %s249, %s253
          %s255 = smul.addr %s31, 4
          %s256 = sadd.s32 %s254, %s255
          %s257 = smul.addr %s256, 64
          %s258 = scalar_lea.hbm %s0, %s257
          %s259 = sshll.u32 %s247, 4
          %s260 = int_to_ptr.vmem [resolvable:$true] %s259
          %265 = dma.hbm_to_vmem [thread:$0]  %s258, 256, %s260, %s244, 128, 128, 8
        $region20: #{tpu_custom_call.1} parent=15 // pred_fallthru
          _
        // Predicated region
        $region21: #{tpu_custom_call.1} parent=15 // pred_check
          %p266 = pneg %p97
        $region22: #{tpu_custom_call.1} parent=15 // pred_check_branch
          %268 = sbr.rel (%p266) target = $region24
        $region23: #{tpu_custom_call.1} parent=15 // pred_region
          %s269 = sand.u32 %s24, 1
          %s270 = scalar_lea.sflag [#allocation6], %s269
          %s271 = sand.u32 %s87, 1
          %s272 = smul.addr %s271, 16
          %s273 = scalar_lea.vmem [#allocation5], %s272
          %s274 = smul.u32 2, %s32
          %s275 = smul.u32 2, %s33
          %s277 = ssub.s32 256, 256
          %278 = vsyncadd %s270, %s277
          %s279 = smul.addr %s274, 2
          %s280 = sadd.s32 %s275, %s279
          %s281 = smul.addr %s31, 4
          %s282 = sadd.s32 %s280, %s281
          %s283 = smul.addr %s282, 64
          %s284 = scalar_lea.hbm %s1, %s283
          %s285 = sshll.u32 %s273, 4
          %s286 = int_to_ptr.vmem [resolvable:$true] %s285
          %291 = dma.hbm_to_vmem [thread:$0]  %s284, 256, %s286, %s270, 128, 128, 8
        $region24: #{tpu_custom_call.1} parent=15 // pred_fallthru
          _
        // Predicated region
        $region25: #{tpu_custom_call.1} parent=15 // pred_check
          %p292 = pneg %p127
        $region26: #{tpu_custom_call.1} parent=15 // pred_check_branch
          %294 = sbr.rel (%p292) target = $region28
        $region27: #{tpu_custom_call.1} parent=15 // pred_region
          %s295 = sand.u32 %s24, 1
          %s296 = scalar_lea.sflag [#allocation6], %s295
          %s297 = sand.u32 %s117, 1
          %s298 = smul.addr %s297, 16
          %s299 = scalar_lea.vmem [#allocation7], %s298
          %s300 = smul.u32 2, %s32
          %s301 = smul.u32 2, %s33
          %s303 = ssub.s32 256, 256
          %304 = vsyncadd %s296, %s303
          %s305 = smul.addr %s300, 2
          %s306 = sadd.s32 %s301, %s305
          %s307 = smul.addr %s31, 4
          %s308 = sadd.s32 %s306, %s307
          %s309 = smul.addr %s308, 64
          %s310 = scalar_lea.hbm %s2, %s309
          %s311 = sshll.u32 %s299, 4
          %s312 = int_to_ptr.vmem [resolvable:$true] %s311
          %317 = dma.hbm_to_vmem [thread:$0]  %s310, 256, %s312, %s296, 128, 128, 8
        $region28: #{tpu_custom_call.1} parent=15 // pred_fallthru
          _
        // Predicated region
        $region29: #{tpu_custom_call.1} parent=15 // pred_check
          %p318 = pneg %p155
        $region30: #{tpu_custom_call.1} parent=15 // pred_check_branch
          %320 = sbr.rel (%p318) target = $region32
        $region31: #{tpu_custom_call.1} parent=15 // pred_region
          %s321 = smul.u32 2, %s33
          %p322 = scmp.lt.s32.totalorder %s31, 1
          %s323 = scalar_select %p322, %s31, 1
          %p324 = scmp.lt.s32.totalorder %s321, 1
          %s325 = scalar_select %p324, %s321, 1
          %s326 = smul.addr %s323, 2
          %s327 = sadd.s32 %s325, %s326
          %s328 = scalar_lea.vmem %s3, %s327
          %s329 = smul.u32 2, %s33
        $region32: #{tpu_custom_call.1} parent=15 // pred_fallthru
          _
      $region16: #{tpu_custom_call.1} parent=5 // pred_fallthru
        _
      %p330 = scmp.le.s32.totalorder 1, %s24
      %p331 = scmp.lt.s32.totalorder %s24, 3
      %p332 = pnand %p330, %p331
      %p333 = pneg %p332
      // Predicated region
      $region33: #{tpu_custom_call.1} parent=5 // pred_check
        _
      $region34: #{tpu_custom_call.1} parent=5 // pred_check_branch
        %335 = sbr.rel (%p332) target = $region36
      $region35: #{tpu_custom_call.1} parent=5 // pred_region
        %s336 = ssub.s32 %s24, 1
        %s337 = sand.u32 %s60, 1
        %s338 = scalar_lea.sflag [#allocation3], %s337
        %s339 = sand.u32 %s60, 1
        %s340 = smul.addr %s339, 16
        %s341 = scalar_lea.vmem [#allocation2], %s340
        // Predicated region
        $region37: #{tpu_custom_call.1} parent=35 // pred_check
          %p342 = pneg %p73
        $region38: #{tpu_custom_call.1} parent=35 // pred_check_branch
          %344 = sbr.rel (%p342) target = $region40
        $region39: #{tpu_custom_call.1} parent=35 // pred_region
          %345 = dma.done %s338, 256
        $region40: #{tpu_custom_call.1} parent=35 // pred_fallthru
          _
        %s346 = sand.u32 %s29, 1
        %s347 = scalar_lea.sflag [#allocation6], %s346
        %s348 = sand.u32 %s90, 1
        %s349 = smul.addr %s348, 16
        %s350 = scalar_lea.vmem [#allocation5], %s349
        // Predicated region
        $region41: #{tpu_custom_call.1} parent=35 // pred_check
          %p351 = pneg %p103
        $region42: #{tpu_custom_call.1} parent=35 // pred_check_branch
          %353 = sbr.rel (%p351) target = $region44
        $region43: #{tpu_custom_call.1} parent=35 // pred_region
          %354 = dma.done %s347, 256
        $region44: #{tpu_custom_call.1} parent=35 // pred_fallthru
          _
        %s355 = sand.u32 %s29, 1
        %s356 = scalar_lea.sflag [#allocation6], %s355
        %s357 = sand.u32 %s120, 1
        %s358 = smul.addr %s357, 16
        %s359 = scalar_lea.vmem [#allocation7], %s358
        // Predicated region
        $region45: #{tpu_custom_call.1} parent=35 // pred_check
          %p360 = pneg %p133
        $region46: #{tpu_custom_call.1} parent=35 // pred_check_branch
          %362 = sbr.rel (%p360) target = $region48
        $region47: #{tpu_custom_call.1} parent=35 // pred_region
          %363 = dma.done %s356, 256
        $region48: #{tpu_custom_call.1} parent=35 // pred_fallthru
          _
        %s364 = sand.u32 %s60, 1
        %s365 = scalar_lea.sflag [#allocation3], %s364
        %s366 = sand.u32 %s60, 1
        %s367 = smul.addr %s366, 16
        %s368 = scalar_lea.vmem [#allocation2], %s367
        %p369 = pneg %p73
        %p370 = pneg %p70
        %s371 = sand.u32 %s29, 1
        %s372 = scalar_lea.sflag [#allocation6], %s371
        %s373 = sand.u32 %s90, 1
        %s374 = smul.addr %s373, 16
        %s375 = scalar_lea.vmem [#allocation5], %s374
        %p376 = pneg %p103
        %p377 = pneg %p100
        %s378 = sand.u32 %s29, 1
        %s379 = scalar_lea.sflag [#allocation6], %s378
        %s380 = sand.u32 %s120, 1
        %s381 = smul.addr %s380, 16
        %s382 = scalar_lea.vmem [#allocation7], %s381
        %p383 = pneg %p133
        %p384 = pneg %p130
        %s385 = smul.u32 2, %s36
        %p386 = scmp.lt.s32.totalorder %s34, 1
        %s387 = scalar_select %p386, %s34, 1
        %p388 = scmp.lt.s32.totalorder %s385, 1
        %s389 = scalar_select %p388, %s385, 1
        %s390 = smul.addr %s387, 2
        %s391 = sadd.s32 %s389, %s390
        %s392 = scalar_lea.vmem %s3, %s391
        %p393 = pneg %p161
        %p394 = pneg %p158
        %p395 = pneg %p191
        %p396 = pneg %p188
        %s397 = sand.u32 %s178, 1
        %s398 = scalar_lea.sflag [#allocation4], %s397
        %s399 = sand.u32 %s178, 1
        %s400 = scalar_lea.vmem [#allocation8], %s399
        %p401 = pneg %p221
        %p402 = pneg %p218
        %s403 = sand.u32 %s208, 1
        %s404 = scalar_lea.sflag [#allocation10], %s403
        %s405 = sand.u32 %s208, 1
        %s406 = scalar_lea.vmem [#allocation9], %s405
        %s407 = smul.u32 2, %s35
        %s408 = smul.u32 2, %s36
        %s409 = smul.u32 2, %s35
        %s410 = smul.u32 2, %s36
        %s411 = smul.u32 2, %s35
        %s412 = smul.u32 2, %s36
        %s413 = smul.u32 2, %s36
        %p414 = scmp.lt.s32.totalorder %s34, 1
        %s415 = scalar_select %p414, %s34, 1
        %p416 = scmp.lt.s32.totalorder %s413, 1
        %s417 = scalar_select %p416, %s413, 1
        %s418 = smul.addr %s415, 2
        %s419 = sadd.s32 %s417, %s418
        %s420 = scalar_lea.vmem %s3, %s419
        %s421 = smul.u32 2, %s36
        %v422 = vld [vmem:[%s341] sm:$0xff]
        %v423 = vld [vmem:[%s341 + $0x8] sm:$0xff]
        %v424 = vunpack.c.l.bf16 %v422
        %v425 = vunpack.c.h.bf16 %v422
        %v426 = vunpack.c.l.bf16 %v423
        %v427 = vunpack.c.h.bf16 %v423
        %v428 = vld [vmem:[%s350] sm:$0xff]
        %v429 = vld [vmem:[%s350 + $0x8] sm:$0xff]
        %v430 = vunpack.c.l.bf16 %v428
        %v431 = vunpack.c.h.bf16 %v428
        %v432 = vunpack.c.l.bf16 %v429
        %v433 = vunpack.c.h.bf16 %v429
        %v434 = vld [vmem:[%s359] sm:$0xff]
        %v435 = vld [vmem:[%s359 + $0x8] sm:$0xff]
        %v436 = vunpack.c.l.bf16 %v434
        %v437 = vunpack.c.h.bf16 %v434
        %v438 = vunpack.c.l.bf16 %v435
        %v439 = vunpack.c.h.bf16 %v435
        %v440 = vld [vmem:[%s420] sm:$0x3]
        %vm441 = vcmp.lt.f32.partialorder %v440, 0.1
        %v442 = vsel %vm441, 0.0, 1.0
        %v443 = vsub.f32 %v430, %v436
        %v444 = vsub.f32 %v431, %v437
        %v445 = vsub.f32 %v432, %v438
        %v446 = vsub.f32 %v433, %v439
        %v448 = vlaneseq
        %v449 = vshrl.u32 %v448, 7
        %v450 = vsub.s32 0, %v449
        %v451 = vrot.slane %v442, %v450
        %v452 = vlaneseq
        %v453 = vshrl.u32 %v452, 7
        %v454 = vsub.s32 1, %v453
        %v455 = vrot.slane %v442, %v454
        %v458 = vmul.f32 %v443, %v451
        %v459 = vmul.f32 %v444, %v455
        %v460 = vmul.f32 %v445, %v451
        %v461 = vmul.f32 %v446, %v455
        %v462 = vand.u32 2147483647, %v458
        %v463 = vand.u32 2147483647, %v459
        %v464 = vand.u32 2147483647, %v460
        %v465 = vand.u32 2147483647, %v461
        %vm466 = vcmp.gt.f32.partialorder %v462, 5.0
        %vm467 = vcmp.gt.f32.partialorder %v463, 5.0
        %vm468 = vcmp.gt.f32.partialorder %v464, 5.0
        %vm469 = vcmp.gt.f32.partialorder %v465, 5.0
        %v470 = vsel %vm466, 0.0, %v458
        %v471 = vsel %vm467, 0.0, %v459
        %v472 = vsel %vm468, 0.0, %v460
        %v473 = vsel %vm469, 0.0, %v461
        %v474 = vadd.f32 %v470, %v471
        %475 = vadd.xlane.f32.xlu0 %v474
        %v476 = vpop.xlane.xlu0 %475
        %v477 = vadd.f32 %v472, %v473
        %478 = vadd.xlane.f32.xlu0 %v477
        %v479 = vpop.xlane.xlu0 %478
        %v480 = vsub.f32 %v424, %v430
        %v481 = vsub.f32 %v425, %v431
        %v482 = vsub.f32 %v426, %v432
        %v483 = vsub.f32 %v427, %v433
        %v484 = vsub.f32 %v480, %v436
        %v485 = vsub.f32 %v481, %v437
        %v486 = vsub.f32 %v482, %v438
        %v487 = vsub.f32 %v483, %v439
        %v489 = vlaneseq
        %v490 = vshrl.u32 %v489, 7
        %v491 = vsub.s32 0, %v490
        %v492 = vrot.slane %v440, %v491
        %v493 = vlaneseq
        %v494 = vshrl.u32 %v493, 7
        %v495 = vsub.s32 1, %v494
        %v496 = vrot.slane %v440, %v495
        %v499 = vmul.f32 %v436, %v492
        %v500 = vmul.f32 %v437, %v496
        %v501 = vmul.f32 %v438, %v492
        %v502 = vmul.f32 %v439, %v496
        %v503 = vadd.f32 %v484, %v499
        %v504 = vadd.f32 %v485, %v500
        %v505 = vadd.f32 %v486, %v501
        %v506 = vadd.f32 %v487, %v502
        %v507 = vmul.f32 %v503, %v503
        %v508 = vmul.f32 %v504, %v504
        %v509 = vmul.f32 %v505, %v505
        %v510 = vmul.f32 %v506, %v506
        %v511 = vadd.f32 %v507, %v508
        %512 = vadd.xlane.f32.xlu0 %v511
        %v513 = vpop.xlane.xlu0 %512
        %v514 = vadd.f32 %v509, %v510
        %515 = vadd.xlane.f32.xlu0 %v514
        %v516 = vpop.xlane.xlu0 %515
        %v519 = vlaneseq
        %v520 = vand.u32 %v519, 127
        %v521 = vlaneseq
        %v522 = vshrl.u32 %v521, 7
        %v523 = vsub.s32 %v520, %v522
        %v524 = vrot.slane %v476, %v523
        %v525 = vadd.s32 %v520, 4294967288
        %v526 = vlaneseq
        %v527 = vshrl.u32 %v526, 7
        %v528 = vsub.s32 %v525, %v527
        %v529 = vrot.slane %v479, %v528
        %vm530 = vcmask 130112
        %v531 = vsel %vm530, %v529, %v524
        %vm533 = vcmask 122880
        %534 = vst.msk [vmem:[%s400] sm:$0x1] %vm533, %v531
        %v537 = vlaneseq
        %v538 = vshrl.u32 %v537, 7
        %v539 = vsub.s32 %v520, %v538
        %v540 = vrot.slane %v513, %v539
        %v541 = vlaneseq
        %v542 = vshrl.u32 %v541, 7
        %v543 = vsub.s32 %v525, %v542
        %v544 = vrot.slane %v516, %v543
        %v545 = vsel %vm530, %v544, %v540
        %547 = vst.msk [vmem:[%s406] sm:$0x1] %vm533, %v545
        %s548 = sand.u32 %s178, 1
        %s549 = scalar_lea.sflag [#allocation4], %s548
        %s550 = sand.u32 %s178, 1
        %s551 = scalar_lea.vmem [#allocation8], %s550
        %s552 = sand.u32 %s208, 1
        %s553 = scalar_lea.sflag [#allocation10], %s552
        %s554 = sand.u32 %s208, 1
        %s555 = scalar_lea.vmem [#allocation9], %s554
        // Predicated region
        $region49: #{tpu_custom_call.1} parent=35 // pred_check
          %p556 = pneg %p188
        $region50: #{tpu_custom_call.1} parent=35 // pred_check_branch
          %558 = sbr.rel (%p556) target = $region52
        $region51: #{tpu_custom_call.1} parent=35 // pred_region
          %s560 = ssub.s32 16, 16
          %561 = vsyncadd %s549, %s560
          %s562 = sadd.s32 %s36, %s35
          %s563 = sadd.s32 %s562, %s34
          %s564 = smul.addr %s563, 16
          %s565 = scalar_lea.hbm %s4, %s564
          %s567 = sshll.u32 %s551, 4
          %s568 = int_to_ptr.vmem [resolvable:$true] %s567
          %570 = dma.vmem_to_hbm [thread:$0]  %s568, 16, %s565, %s549
        $region52: #{tpu_custom_call.1} parent=35 // pred_fallthru
          _
        // Predicated region
        $region53: #{tpu_custom_call.1} parent=35 // pred_check
          %p571 = pneg %p218
        $region54: #{tpu_custom_call.1} parent=35 // pred_check_branch
          %573 = sbr.rel (%p571) target = $region56
        $region55: #{tpu_custom_call.1} parent=35 // pred_region
          %s575 = ssub.s32 16, 16
          %576 = vsyncadd %s553, %s575
          %s577 = sadd.s32 %s36, %s35
          %s578 = sadd.s32 %s577, %s34
          %s579 = smul.addr %s578, 16
          %s580 = scalar_lea.hbm %s5, %s579
          %s582 = sshll.u32 %s555, 4
          %s583 = int_to_ptr.vmem [resolvable:$true] %s582
          %585 = dma.vmem_to_hbm [thread:$0]  %s583, 16, %s580, %s553
        $region56: #{tpu_custom_call.1} parent=35 // pred_fallthru
          _
      $region36: #{tpu_custom_call.1} parent=5 // pred_fallthru
        _
      %p586 = scmp.le.s32.totalorder 2, %s24
      // Predicated region
      $region57: #{tpu_custom_call.1} parent=5 // pred_check
        %p587 = pneg %p586
      $region58: #{tpu_custom_call.1} parent=5 // pred_check_branch
        %589 = sbr.rel (%p587) target = $region60
      $region59: #{tpu_custom_call.1} parent=5 // pred_region
        %s590 = ssub.s32 %s24, 2
        // Predicated region
        $region61: #{tpu_custom_call.1} parent=59 // pred_check
          %p591 = pneg %p194
        $region62: #{tpu_custom_call.1} parent=59 // pred_check_branch
          %593 = sbr.rel (%p591) target = $region64
        $region63: #{tpu_custom_call.1} parent=59 // pred_region
          %s594 = sand.u32 %s179, 1
          %s595 = scalar_lea.sflag [#allocation4], %s594
          %s596 = sand.u32 %s179, 1
          %s597 = scalar_lea.vmem [#allocation8], %s596
          %598 = dma.done %s595, 16
        $region64: #{tpu_custom_call.1} parent=59 // pred_fallthru
          _
        // Predicated region
        $region65: #{tpu_custom_call.1} parent=59 // pred_check
          %p599 = pneg %p224
        $region66: #{tpu_custom_call.1} parent=59 // pred_check_branch
          %601 = sbr.rel (%p599) target = $region68
        $region67: #{tpu_custom_call.1} parent=59 // pred_region
          %s602 = sand.u32 %s209, 1
          %s603 = scalar_lea.sflag [#allocation10], %s602
          %s604 = sand.u32 %s209, 1
          %s605 = scalar_lea.vmem [#allocation9], %s604
          %606 = dma.done %s603, 16
        $region68: #{tpu_custom_call.1} parent=59 // pred_fallthru
          _
      $region60: #{tpu_custom_call.1} parent=5 // pred_fallthru
        _
    $region6: #{tpu_custom_call.1} parent=1 // loop_footer
      %s28 = sadd.s32 1, %s24
    $region7: #{tpu_custom_call.1} parent=1 // loop_footer_branch
      %23 = sbr.rel target = $region3
    $region8: #{tpu_custom_call.1} parent=1 // loop_exit
      _
    %607 = vsyncpa [#allocation3], 1
    %s608 = scalar_lea.sflag [#allocation3], 1
    %609 = vsyncpa %s608, 1
    %610 = vsyncpa [#allocation6], 1
    %s611 = scalar_lea.sflag [#allocation6], 1
    %612 = vsyncpa %s611, 1
    %613 = vsyncpa [#allocation4], 1
    %s614 = scalar_lea.sflag [#allocation4], 1
    %615 = vsyncpa %s614, 1
    %616 = vsyncpa [#allocation10], 1
    %s617 = scalar_lea.sflag [#allocation10], 1
    %618 = vsyncpa %s617, 1

</llo_original>
